<compile_context>
chip_gen: v7x
topology: tpu7x:2x2x1
jax: 0.10.0
libtpu: 0.0.40
codegen_flags: <defaults>
</compile_context>

<pallas_src>
import numpy as np
import jax
import jax.numpy as jnp
from jax.experimental import pallas as pl
from jax.experimental.pallas import tpu as pltpu


_FILTER_TAPS = {
    1: [1.0],
    2: [1.0, 1.0],
    3: [1.0, 2.0, 1.0],
    4: [1.0, 3.0, 3.0, 1.0],
    5: [1.0, 4.0, 6.0, 4.0, 1.0],
    6: [1.0, 5.0, 10.0, 10.0, 5.0, 1.0],
    7: [1.0, 6.0, 15.0, 20.0, 15.0, 6.0, 1.0],
}


def get_filter_np(filt_size=3):
    a = np.array(_FILTER_TAPS[filt_size], dtype=np.float64)
    f = a[:, None] * a[None, :]
    return (f / f.sum()).astype(np.float32)


def _pad_mode(pad_type):
    return {
        "reflect": "reflect", "refl": "reflect",
        "replicate": "edge", "repl": "edge",
        "zero": "constant",
    }[pad_type]


def _tree_sum(xs):
    """Balanced pairwise sum (breaks the serial accumulator chain)."""
    xs = list(xs)
    while len(xs) > 1:
        nxt = [xs[i] + xs[i + 1] for i in range(0, len(xs) - 1, 2)]
        if len(xs) % 2:
            nxt.append(xs[-1])
        xs = nxt
    return xs[0]


def _ds(start, size, stride):
    if stride == 1:
        return pl.ds(start, size)
    return pl.ds(start, size, stride=stride)


def make_downsample_kernel(h, w, p_lo, p_hi, filt_size, stride,
                           h_out, w_out, pad_mode, taps):
    """Kernel over one (H, W, NC_BLOCK) slab; channels live in the lane dim."""
    w_pad = w + p_lo + p_hi

    def kernel(x_ref, o_ref, pad_ref, hbuf_ref):
        nc = x_ref.shape[-1]
        x = x_ref[...].astype(jnp.float32)           # (h, w, nc)

        # ---- width border columns (sublane dim) -----------------------------
        left, right = [], []
        for j in range(p_lo):
            if pad_mode == "reflect":
                left.append(x[:, p_lo - j:p_lo - j + 1, :])
            elif pad_mode == "edge":
                left.append(x[:, 0:1, :])
            else:  # zero
                left.append(jnp.zeros((h, 1, nc), jnp.float32))
        for j in range(p_hi):
            if pad_mode == "reflect":
                right.append(x[:, w - 2 - j:w - 1 - j, :])
            elif pad_mode == "edge":
                right.append(x[:, w - 1:w, :])
            else:
                right.append(jnp.zeros((h, 1, nc), jnp.float32))
        xw = jnp.concatenate(left + [x] + right, axis=1) if (p_lo or p_hi) else x

        # ---- height border rows (major dim) ----------------------------------
        top, bot = [], []
        for r in range(p_lo):
            if pad_mode == "reflect":
                top.append(xw[p_lo - r:p_lo - r + 1, :, :])
            elif pad_mode == "edge":
                top.append(xw[0:1, :, :])
            else:
                top.append(jnp.zeros((1, w_pad, nc), jnp.float32))
        for r in range(p_hi):
            if pad_mode == "reflect":
                bot.append(xw[h - 2 - r:h - 1 - r, :, :])
            elif pad_mode == "edge":
                bot.append(xw[h - 1:h, :, :])
            else:
                bot.append(jnp.zeros((1, w_pad, nc), jnp.float32))
        xp = jnp.concatenate(top + [xw] + bot, axis=0) if (p_lo or p_hi) else xw
        pad_ref[...] = xp                              # (h_pad, w_pad, nc)

        # ---- separable binomial blur + stride subsample ----------------------
        # Column (H) pass: hbuf[i] = sum_dy a[dy] * padded[stride*i + dy]
        hbuf_ref[...] = _tree_sum(
            taps[dy] * pad_ref[_ds(dy, h_out, stride), :, :]
            for dy in range(filt_size))
        # Row (W) pass: out[:, j] = sum_dx a[dx] * hbuf[:, stride*j + dx]
        # (sublane-strided reads; lane-dense store of the output slab)
        o_ref[...] = _tree_sum(
            taps[dx] * hbuf_ref[:, _ds(dx, w_out, stride), :]
            for dx in range(filt_size)).astype(o_ref.dtype)

    return kernel


def downsample_pallas(x, channels, pad_type="reflect", filt_size=3, stride=2,
                      pad_off=0):
    n, c, h, w = x.shape
    assert c == channels
    p_lo = int(1.0 * (filt_size - 1) / 2) + pad_off
    p_hi = int(np.ceil(1.0 * (filt_size - 1) / 2)) + pad_off
    mode = _pad_mode(pad_type)

    if filt_size == 1:
        # Pure strided subsampling path (no filtering).
        if pad_off == 0:
            return x[:, :, ::stride, ::stride]
        xp = jnp.pad(x, ((0, 0), (0, 0), (p_lo, p_hi), (p_lo, p_hi)), mode=mode)
        return xp[:, :, ::stride, ::stride]

    h_pad, w_pad = h + p_lo + p_hi, w + p_lo + p_hi
    h_out = (h_pad - filt_size) // stride + 1
    w_out = (w_pad - filt_size) // stride + 1

    nc = n * c
    itemsize = jnp.dtype(x.dtype).itemsize

    # --- choose the NC block (lane dim) so double-buffered blocks + scratch
    #     fit comfortably in VMEM on every generation (v7x: 64 MiB physical) ---
    per_ch = ((2 * h * w + 2 * h_out * w_out) * itemsize
              + 4 * (h_pad * w_pad + h_out * w_pad))
    budget = 24 * 1024 * 1024
    max_blk = max(1, budget // per_ch)
    if nc <= max_blk:
        nc_blk = nc                      # whole NC in one block (full last dim)
    else:
        nc_blk = max(128, (max_blk // 128) * 128)   # keep last dim 128-aligned
    nc_padded = ((nc + nc_blk - 1) // nc_blk) * nc_blk
    # TODO(synk): tile H with halo handling for very large spatial inputs;
    #             blocks currently span the full HxW extent per grid step.

    # Lane-dense layout glue: (N, C, H, W) -> (H, W, N*C); only HBM intermediate.
    xt = jnp.transpose(x, (2, 3, 0, 1)).reshape(h, w, nc)
    if nc_padded != nc:
        xt = jnp.pad(xt, ((0, 0), (0, 0), (0, nc_padded - nc)))

    # Separable taps (filter = outer(a,a)/sum = outer(a/s, a/s)) as constants.
    a = np.array(_FILTER_TAPS[filt_size], dtype=np.float64)
    taps = [float(t) for t in (a / a.sum())]

    kernel = make_downsample_kernel(h, w, p_lo, p_hi, filt_size, stride,
                                    h_out, w_out, mode, taps)

    est_vmem = (2 * (h * w + h_out * w_out) * nc_blk * itemsize
                + 4 * nc_blk * (h_pad * w_pad + h_out * w_pad))
    vmem_limit = int(min(48 * 1024 * 1024, max(32 * 1024 * 1024, 2 * est_vmem)))

    out_hwc = pl.pallas_call(
        kernel,
        out_shape=jax.ShapeDtypeStruct((h_out, w_out, nc_padded), x.dtype),
        grid=(nc_padded // nc_blk,),
        in_specs=[pl.BlockSpec((h, w, nc_blk), lambda i: (0, 0, i))],
        out_specs=pl.BlockSpec((h_out, w_out, nc_blk), lambda i: (0, 0, i)),
        scratch_shapes=[
            pltpu.VMEM((h_pad, w_pad, nc_blk), jnp.float32),   # padded slab
            pltpu.VMEM((h_out, w_pad, nc_blk), jnp.float32),   # column-pass buf
        ],
        compiler_params=pltpu.CompilerParams(
            dimension_semantics=("parallel",),
            vmem_limit_bytes=vmem_limit),
        cost_estimate=pl.CostEstimate(
            flops=2 * filt_size * nc_padded * (h_out * w_pad + h_out * w_out),
            transcendentals=0,
            bytes_accessed=(h * w + h_out * w_out) * nc_padded * itemsize),
    )(xt)

    out = out_hwc[:, :, :nc] if nc_padded != nc else out_hwc
    return out.reshape(h_out, w_out, n, c).transpose(2, 3, 0, 1)


if __name__ == "__main__":
    key = jax.random.PRNGKey(0)
    N, C, H, W = 2, 4, 16, 16
    x = jax.random.normal(key, (N, C, H, W), dtype=jnp.float32)

    out = downsample_pallas(x, channels=C, pad_type="reflect",
                            filt_size=3, stride=2, pad_off=0)
    out = jax.block_until_ready(out)
    assert out.shape == (N, C, 8, 8), out.shape

    # Reference: F.conv2d(reflection_pad(x), binomial_filter, stride=2, groups=C)
    filt2d = jnp.asarray(get_filter_np(3))
    filt_full = jnp.broadcast_to(filt2d, (C, 1, 3, 3))
    xp = jnp.pad(x, ((0, 0), (0, 0), (1, 1), (1, 1)), mode="reflect")
    ref = jax.lax.conv_general_dilated(
        xp, filt_full, window_strides=(2, 2), padding="VALID",
        dimension_numbers=("NCHW", "OIHW", "NCHW"), feature_group_count=C)

    assert jnp.allclose(out, ref, atol=1e-5, rtol=1e-5), \
        float(jnp.max(jnp.abs(out - ref)))
    print("KERNEL_OK")
</pallas_src>

<mosaic_0001>
module attributes {stable_mosaic.version = 11 : i64} {
  func.func @kernel(%arg0: i32, %arg1: memref<16x16x8xf32, #tpu.memory_space<vmem>>, %arg2: memref<8x8x8xf32, #tpu.memory_space<vmem>>, %arg3: memref<18x18x8xf32, #tpu.memory_space<vmem>>, %arg4: memref<8x18x8xf32, #tpu.memory_space<vmem>>) attributes {dimension_semantics = [#tpu.dimension_semantics<parallel>], iteration_bounds = array<i64: 1>, scalar_prefetch = 0 : i64, scratch_operands = 2 : i64, tpu.core_type = #tpu.core_type<tc>, window_params = [{transform_indices = @transform_0, window_bounds = array<i64: 16, 16, 8>}, {transform_indices = @transform_1, window_bounds = array<i64: 8, 8, 8>}]} {
    %c0 = arith.constant 0 : index
    %c0_0 = arith.constant 0 : index
    %c0_1 = arith.constant 0 : index
    %0 = vector.load %arg1[%c0, %c0_0, %c0_1] : memref<16x16x8xf32, #tpu.memory_space<vmem>>, vector<16x16x8xf32>
    %1 = vector.extract_strided_slice %0 {offsets = [0, 1, 0], sizes = [16, 1, 8], strides = [1, 1, 1]} : vector<16x16x8xf32> to vector<16x1x8xf32>
    %2 = vector.extract_strided_slice %0 {offsets = [0, 14, 0], sizes = [16, 1, 8], strides = [1, 1, 1]} : vector<16x16x8xf32> to vector<16x1x8xf32>
    %3 = tpu.concatenate %1, %0, %2 in 1 : vector<16x1x8xf32>, vector<16x16x8xf32>, vector<16x1x8xf32> -> vector<16x18x8xf32>
    %4 = vector.extract_strided_slice %3 {offsets = [1, 0, 0], sizes = [1, 18, 8], strides = [1, 1, 1]} : vector<16x18x8xf32> to vector<1x18x8xf32>
    %5 = vector.extract_strided_slice %3 {offsets = [14, 0, 0], sizes = [1, 18, 8], strides = [1, 1, 1]} : vector<16x18x8xf32> to vector<1x18x8xf32>
    %6 = tpu.concatenate %4, %3, %5 in 0 : vector<1x18x8xf32>, vector<16x18x8xf32>, vector<1x18x8xf32> -> vector<18x18x8xf32>
    %c0_2 = arith.constant 0 : index
    %c0_3 = arith.constant 0 : index
    %c0_4 = arith.constant 0 : index
    %7 = vector.load %arg3[%c0_2, %c0_3, %c0_4] : memref<18x18x8xf32, #tpu.memory_space<vmem>>, vector<18x18x8xf32>
    tpu.vector_store %arg3[%c0_2, %c0_3, %c0_4], %6 {strides = array<i32>} : memref<18x18x8xf32, #tpu.memory_space<vmem>>, vector<18x18x8xf32>,
    %c0_5 = arith.constant 0 : index
    %c0_6 = arith.constant 0 : index
    %c0_7 = arith.constant 0 : index
    %8 = tpu.strided_load %arg3[%c0_5, %c0_6, %c0_7] {strides = array<i32: 2, 1, 1>} : memref<18x18x8xf32, #tpu.memory_space<vmem>>, vector<8x18x8xf32>
    %cst = arith.constant 2.500000e-01 : f32
    %9 = vector.broadcast %cst : f32 to vector<8x18x8xf32>
    %10 = arith.mulf %9, %8 : vector<8x18x8xf32>
    %c1 = arith.constant 1 : index
    %c0_8 = arith.constant 0 : index
    %c0_9 = arith.constant 0 : index
    %11 = tpu.strided_load %arg3[%c1, %c0_8, %c0_9] {strides = array<i32: 2, 1, 1>} : memref<18x18x8xf32, #tpu.memory_space<vmem>>, vector<8x18x8xf32>
    %cst_10 = arith.constant 5.000000e-01 : f32
    %12 = vector.broadcast %cst_10 : f32 to vector<8x18x8xf32>
    %13 = arith.mulf %12, %11 : vector<8x18x8xf32>
    %c2 = arith.constant 2 : index
    %c0_11 = arith.constant 0 : index
    %c0_12 = arith.constant 0 : index
    %14 = tpu.strided_load %arg3[%c2, %c0_11, %c0_12] {strides = array<i32: 2, 1, 1>} : memref<18x18x8xf32, #tpu.memory_space<vmem>>, vector<8x18x8xf32>
    %cst_13 = arith.constant 2.500000e-01 : f32
    %15 = vector.broadcast %cst_13 : f32 to vector<8x18x8xf32>
    %16 = arith.mulf %15, %14 : vector<8x18x8xf32>
    %17 = arith.addf %10, %13 : vector<8x18x8xf32>
    %18 = arith.addf %17, %16 : vector<8x18x8xf32>
    %c0_14 = arith.constant 0 : index
    %c0_15 = arith.constant 0 : index
    %c0_16 = arith.constant 0 : index
    %19 = vector.load %arg4[%c0_14, %c0_15, %c0_16] : memref<8x18x8xf32, #tpu.memory_space<vmem>>, vector<8x18x8xf32>
    tpu.vector_store %arg4[%c0_14, %c0_15, %c0_16], %18 {strides = array<i32>} : memref<8x18x8xf32, #tpu.memory_space<vmem>>, vector<8x18x8xf32>,
    %c0_17 = arith.constant 0 : index
    %c0_18 = arith.constant 0 : index
    %c0_19 = arith.constant 0 : index
    %20 = tpu.strided_load %arg4[%c0_17, %c0_18, %c0_19] {strides = array<i32: 1, 2, 1>} : memref<8x18x8xf32, #tpu.memory_space<vmem>>, vector<8x8x8xf32>
    %cst_20 = arith.constant 2.500000e-01 : f32
    %21 = vector.broadcast %cst_20 : f32 to vector<8x8x8xf32>
    %22 = arith.mulf %21, %20 : vector<8x8x8xf32>
    %c0_21 = arith.constant 0 : index
    %c1_22 = arith.constant 1 : index
    %c0_23 = arith.constant 0 : index
    %23 = tpu.strided_load %arg4[%c0_21, %c1_22, %c0_23] {strides = array<i32: 1, 2, 1>} : memref<8x18x8xf32, #tpu.memory_space<vmem>>, vector<8x8x8xf32>
    %cst_24 = arith.constant 5.000000e-01 : f32
    %24 = vector.broadcast %cst_24 : f32 to vector<8x8x8xf32>
    %25 = arith.mulf %24, %23 : vector<8x8x8xf32>
    %c0_25 = arith.constant 0 : index
    %c2_26 = arith.constant 2 : index
    %c0_27 = arith.constant 0 : index
    %26 = tpu.strided_load %arg4[%c0_25, %c2_26, %c0_27] {strides = array<i32: 1, 2, 1>} : memref<8x18x8xf32, #tpu.memory_space<vmem>>, vector<8x8x8xf32>
    %cst_28 = arith.constant 2.500000e-01 : f32
    %27 = vector.broadcast %cst_28 : f32 to vector<8x8x8xf32>
    %28 = arith.mulf %27, %26 : vector<8x8x8xf32>
    %29 = arith.addf %22, %25 : vector<8x8x8xf32>
    %30 = arith.addf %29, %28 : vector<8x8x8xf32>
    %c0_29 = arith.constant 0 : index
    %c0_30 = arith.constant 0 : index
    %c0_31 = arith.constant 0 : index
    %31 = vector.load %arg2[%c0_29, %c0_30, %c0_31] : memref<8x8x8xf32, #tpu.memory_space<vmem>>, vector<8x8x8xf32>
    tpu.vector_store %arg2[%c0_29, %c0_30, %c0_31], %30 {strides = array<i32>} : memref<8x8x8xf32, #tpu.memory_space<vmem>>, vector<8x8x8xf32>,
    return
  }
  func.func @transform_0(%arg0: i32) -> (i32, i32, i32) {
    %c0_i32 = arith.constant 0 : i32
    %c0_i32_0 = arith.constant 0 : i32
    %c0_i32_1 = arith.constant 0 : i32
    return %c0_i32, %c0_i32_0, %arg0 : i32, i32, i32
  }
  func.func @transform_1(%arg0: i32) -> (i32, i32, i32) {
    %c0_i32 = arith.constant 0 : i32
    %c0_i32_0 = arith.constant 0 : i32
    %c0_i32_1 = arith.constant 0 : i32
    return %c0_i32, %c0_i32_0, %arg0 : i32, i32, i32
  }
}

</mosaic_0001>

<llo_original>
// kernel: tpu_custom_call.1
$region0: #{tpu_custom_call.1}
  #allocation0 [shape = 'u32[]', space=smem, size = 0x4, offset = 0x4, fixed_abs, tag = 'smem constant byte address 0x4 - core index']
  #allocation1 [shape = 'u32[144,128]{1,0:T(1,128)}', space=vmem, size = 0x12000, scoped, tag = 'internal scratch']
  #allocation2 [shape = 'f32[18,18,8]{2,1,0:T(8,128)}', space=vmem, size = 0x36000, scoped, tag = 'scratch operand']
  #allocation3 [shape = 'f32[8,18,8]{2,1,0:T(8,128)}', space=vmem, size = 0x18000, scoped, tag = 'scratch operand']
  %s0 = inlined_call_operand.vmem [shape: f32[16,16,8], index: 0, kind: input, shape index: {}]
  %s1 = inlined_call_operand.hbm [shape: f32[8,8,8], index: 1, kind: output, shape index: {}]
  %s2 = sld [smem:[#allocation0]]
  $region14: #{tpu_custom_call.1} parent=0
    _
  %s4 = ssub.s32 1, %s2
  %s5 = scalar_select 0, %s4, %s2
  $region1: #{tpu_custom_call.1} parent=0
    #allocation4 [shape = 'u8[32768]{0}', space=vmem, size = 0x8000, scoped, tag = 'output window, operand 0, single buffered']
    #allocation5 [shape = 's32[1]{0}', space=sflag, size = 0x4, scoped, tag = 'scoped memory for tpu_custom_call.1']
    %6 = vsyncpa [#allocation5], 0
    // Predicated region
    $region2: #{tpu_custom_call.1} parent=1 // pred_check
      _
    $region3: #{tpu_custom_call.1} parent=1 // pred_check_branch
      %8 = sbr.rel (0) target = $region5
    $region4: #{tpu_custom_call.1} parent=1 // pred_region
      _
    $region5: #{tpu_custom_call.1} parent=1 // pred_fallthru
      _
    %v9 = vld [vmem:[%s0] sm:$0xff]
    %v10 = vld [vmem:[%s0 + $0x8] sm:$0xff]
    %v11 = vld [vmem:[%s0 + $0x10] sm:$0xff]
    %v12 = vld [vmem:[%s0 + $0x18] sm:$0xff]
    %v13 = vld [vmem:[%s0 + $0x20] sm:$0xff]
    %v14 = vld [vmem:[%s0 + $0x28] sm:$0xff]
    %v15 = vld [vmem:[%s0 + $0x30] sm:$0xff]
    %v16 = vld [vmem:[%s0 + $0x38] sm:$0xff]
    %v17 = vld [vmem:[%s0 + $0x40] sm:$0xff]
    %v18 = vld [vmem:[%s0 + $0x48] sm:$0xff]
    %v19 = vld [vmem:[%s0 + $0x50] sm:$0xff]
    %v20 = vld [vmem:[%s0 + $0x58] sm:$0xff]
    %v21 = vld [vmem:[%s0 + $0x60] sm:$0xff]
    %v22 = vld [vmem:[%s0 + $0x68] sm:$0xff]
    %v23 = vld [vmem:[%s0 + $0x70] sm:$0xff]
    %v24 = vld [vmem:[%s0 + $0x78] sm:$0xff]
    %v25 = vld [vmem:[%s0 + $0x80] sm:$0xff]
    %v26 = vld [vmem:[%s0 + $0x88] sm:$0xff]
    %v27 = vld [vmem:[%s0 + $0x90] sm:$0xff]
    %v28 = vld [vmem:[%s0 + $0x98] sm:$0xff]
    %v29 = vld [vmem:[%s0 + $0xa0] sm:$0xff]
    %v30 = vld [vmem:[%s0 + $0xa8] sm:$0xff]
    %v31 = vld [vmem:[%s0 + $0xb0] sm:$0xff]
    %v32 = vld [vmem:[%s0 + $0xb8] sm:$0xff]
    %v33 = vld [vmem:[%s0 + $0xc0] sm:$0xff]
    %v34 = vld [vmem:[%s0 + $0xc8] sm:$0xff]
    %v35 = vld [vmem:[%s0 + $0xd0] sm:$0xff]
    %v36 = vld [vmem:[%s0 + $0xd8] sm:$0xff]
    %v37 = vld [vmem:[%s0 + $0xe0] sm:$0xff]
    %v38 = vld [vmem:[%s0 + $0xe8] sm:$0xff]
    %v39 = vld [vmem:[%s0 + $0xf0] sm:$0xff]
    %v40 = vld [vmem:[%s0 + $0xf8] sm:$0xff]
    %v57 = vrot.slane %v9, 1
    %v58 = vrot.slane %v11, 1
    %v59 = vrot.slane %v13, 1
    %v60 = vrot.slane %v15, 1
    %v61 = vrot.slane %v17, 1
    %v62 = vrot.slane %v19, 1
    %v63 = vrot.slane %v21, 1
    %v64 = vrot.slane %v23, 1
    %v65 = vrot.slane %v25, 1
    %v66 = vrot.slane %v27, 1
    %v67 = vrot.slane %v29, 1
    %v68 = vrot.slane %v31, 1
    %v69 = vrot.slane %v33, 1
    %v70 = vrot.slane %v35, 1
    %v71 = vrot.slane %v37, 1
    %v72 = vrot.slane %v39, 1
    %vm105 = vcmask 1040384
    %v106 = vrot.slane %v9, 7
    %v107 = vrot.slane %v10, 7
    %v108 = vsel %vm105, %v106, %v107
    %v109 = vrot.slane %v11, 7
    %v110 = vrot.slane %v12, 7
    %v111 = vsel %vm105, %v109, %v110
    %v112 = vrot.slane %v13, 7
    %v113 = vrot.slane %v14, 7
    %v114 = vsel %vm105, %v112, %v113
    %v115 = vrot.slane %v15, 7
    %v116 = vrot.slane %v16, 7
    %v117 = vsel %vm105, %v115, %v116
    %v118 = vrot.slane %v17, 7
    %v119 = vrot.slane %v18, 7
    %v120 = vsel %vm105, %v118, %v119
    %v121 = vrot.slane %v19, 7
    %v122 = vrot.slane %v20, 7
    %v123 = vsel %vm105, %v121, %v122
    %v124 = vrot.slane %v21, 7
    %v125 = vrot.slane %v22, 7
    %v126 = vsel %vm105, %v124, %v125
    %v127 = vrot.slane %v23, 7
    %v128 = vrot.slane %v24, 7
    %v129 = vsel %vm105, %v127, %v128
    %v130 = vrot.slane %v25, 7
    %v131 = vrot.slane %v26, 7
    %v132 = vsel %vm105, %v130, %v131
    %v133 = vrot.slane %v27, 7
    %v134 = vrot.slane %v28, 7
    %v135 = vsel %vm105, %v133, %v134
    %v136 = vrot.slane %v29, 7
    %v137 = vrot.slane %v30, 7
    %v138 = vsel %vm105, %v136, %v137
    %v139 = vrot.slane %v31, 7
    %v140 = vrot.slane %v32, 7
    %v141 = vsel %vm105, %v139, %v140
    %v142 = vrot.slane %v33, 7
    %v143 = vrot.slane %v34, 7
    %v144 = vsel %vm105, %v142, %v143
    %v145 = vrot.slane %v35, 7
    %v146 = vrot.slane %v36, 7
    %v147 = vsel %vm105, %v145, %v146
    %v148 = vrot.slane %v37, 7
    %v149 = vrot.slane %v38, 7
    %v150 = vsel %vm105, %v148, %v149
    %v151 = vrot.slane %v39, 7
    %v152 = vrot.slane %v40, 7
    %v153 = vsel %vm105, %v151, %v152
    %v202 = vrot.slane %v10, 5
    %v203 = vrot.slane %v12, 5
    %v204 = vrot.slane %v14, 5
    %v205 = vrot.slane %v16, 5
    %v206 = vrot.slane %v18, 5
    %v207 = vrot.slane %v20, 5
    %v208 = vrot.slane %v22, 5
    %v209 = vrot.slane %v24, 5
    %v210 = vrot.slane %v26, 5
    %v211 = vrot.slane %v28, 5
    %v212 = vrot.slane %v30, 5
    %v213 = vrot.slane %v32, 5
    %v214 = vrot.slane %v34, 5
    %v215 = vrot.slane %v36, 5
    %v216 = vrot.slane %v38, 5
    %v217 = vrot.slane %v40, 5
    %v234 = vsel %vm105, %v57, %v106
    %v235 = vsel %vm105, %v58, %v109
    %v236 = vsel %vm105, %v59, %v112
    %v237 = vsel %vm105, %v60, %v115
    %v238 = vsel %vm105, %v61, %v118
    %v239 = vsel %vm105, %v62, %v121
    %v240 = vsel %vm105, %v63, %v124
    %v241 = vsel %vm105, %v64, %v127
    %v242 = vsel %vm105, %v65, %v130
    %v243 = vsel %vm105, %v66, %v133
    %v244 = vsel %vm105, %v67, %v136
    %v245 = vsel %vm105, %v68, %v139
    %v246 = vsel %vm105, %v69, %v142
    %v247 = vsel %vm105, %v70, %v145
    %v248 = vsel %vm105, %v71, %v148
    %v249 = vsel %vm105, %v72, %v151
    %v250 = vsel %vm105, %v107, %v202
    %v251 = vsel %vm105, %v110, %v203
    %v252 = vsel %vm105, %v113, %v204
    %v253 = vsel %vm105, %v116, %v205
    %v254 = vsel %vm105, %v119, %v206
    %v255 = vsel %vm105, %v122, %v207
    %v256 = vsel %vm105, %v125, %v208
    %v257 = vsel %vm105, %v128, %v209
    %v258 = vsel %vm105, %v131, %v210
    %v259 = vsel %vm105, %v134, %v211
    %v260 = vsel %vm105, %v137, %v212
    %v261 = vsel %vm105, %v140, %v213
    %v262 = vsel %vm105, %v143, %v214
    %v263 = vsel %vm105, %v146, %v215
    %v264 = vsel %vm105, %v149, %v216
    %v265 = vsel %vm105, %v152, %v217
    %vm266 = vcmask 64512
    %267 = vst.msk [vmem:[#allocation2] sm:$0xff] %vm266, %v235
    %268 = vst.msk [vmem:[#allocation2 + $0x8] sm:$0xff] %vm266, %v111
    %vm269 = vcmask 58368
    %270 = vst.msk [vmem:[#allocation2 + $0x10] sm:$0x3] %vm269, %v251
    %271 = vst.msk [vmem:[#allocation2 + $0x18] sm:$0xff] %vm266, %v234
    %272 = vst.msk [vmem:[#allocation2 + $0x20] sm:$0xff] %vm266, %v108
    %273 = vst.msk [vmem:[#allocation2 + $0x28] sm:$0x3] %vm269, %v250
    %274 = vst.msk [vmem:[#allocation2 + $0x30] sm:$0xff] %vm266, %v235
    %275 = vst.msk [vmem:[#allocation2 + $0x38] sm:$0xff] %vm266, %v111
    %276 = vst.msk [vmem:[#allocation2 + $0x40] sm:$0x3] %vm269, %v251
    %277 = vst.msk [vmem:[#allocation2 + $0x48] sm:$0xff] %vm266, %v236
    %278 = vst.msk [vmem:[#allocation2 + $0x50] sm:$0xff] %vm266, %v114
    %279 = vst.msk [vmem:[#allocation2 + $0x58] sm:$0x3] %vm269, %v252
    %280 = vst.msk [vmem:[#allocation2 + $0x60] sm:$0xff] %vm266, %v237
    %281 = vst.msk [vmem:[#allocation2 + $0x68] sm:$0xff] %vm266, %v117
    %282 = vst.msk [vmem:[#allocation2 + $0x70] sm:$0x3] %vm269, %v253
    %283 = vst.msk [vmem:[#allocation2 + $0x78] sm:$0xff] %vm266, %v238
    %284 = vst.msk [vmem:[#allocation2 + $0x80] sm:$0xff] %vm266, %v120
    %285 = vst.msk [vmem:[#allocation2 + $0x88] sm:$0x3] %vm269, %v254
    %286 = vst.msk [vmem:[#allocation2 + $0x90] sm:$0xff] %vm266, %v239
    %287 = vst.msk [vmem:[#allocation2 + $0x98] sm:$0xff] %vm266, %v123
    %288 = vst.msk [vmem:[#allocation2 + $0xa0] sm:$0x3] %vm269, %v255
    %289 = vst.msk [vmem:[#allocation2 + $0xa8] sm:$0xff] %vm266, %v240
    %290 = vst.msk [vmem:[#allocation2 + $0xb0] sm:$0xff] %vm266, %v126
    %291 = vst.msk [vmem:[#allocation2 + $0xb8] sm:$0x3] %vm269, %v256
    %292 = vst.msk [vmem:[#allocation2 + $0xc0] sm:$0xff] %vm266, %v241
    %293 = vst.msk [vmem:[#allocation2 + $0xc8] sm:$0xff] %vm266, %v129
    %294 = vst.msk [vmem:[#allocation2 + $0xd0] sm:$0x3] %vm269, %v257
    %295 = vst.msk [vmem:[#allocation2 + $0xd8] sm:$0xff] %vm266, %v242
    %296 = vst.msk [vmem:[#allocation2 + $0xe0] sm:$0xff] %vm266, %v132
    %297 = vst.msk [vmem:[#allocation2 + $0xe8] sm:$0x3] %vm269, %v258
    %298 = vst.msk [vmem:[#allocation2 + $0xf0] sm:$0xff] %vm266, %v243
    %299 = vst.msk [vmem:[#allocation2 + $0xf8] sm:$0xff] %vm266, %v135
    %300 = vst.msk [vmem:[#allocation2 + $0x100] sm:$0x3] %vm269, %v259
    %301 = vst.msk [vmem:[#allocation2 + $0x108] sm:$0xff] %vm266, %v244
    %302 = vst.msk [vmem:[#allocation2 + $0x110] sm:$0xff] %vm266, %v138
    %303 = vst.msk [vmem:[#allocation2 + $0x118] sm:$0x3] %vm269, %v260
    %304 = vst.msk [vmem:[#allocation2 + $0x120] sm:$0xff] %vm266, %v245
    %305 = vst.msk [vmem:[#allocation2 + $0x128] sm:$0xff] %vm266, %v141
    %306 = vst.msk [vmem:[#allocation2 + $0x130] sm:$0x3] %vm269, %v261
    %307 = vst.msk [vmem:[#allocation2 + $0x138] sm:$0xff] %vm266, %v246
    %308 = vst.msk [vmem:[#allocation2 + $0x140] sm:$0xff] %vm266, %v144
    %309 = vst.msk [vmem:[#allocation2 + $0x148] sm:$0x3] %vm269, %v262
    %310 = vst.msk [vmem:[#allocation2 + $0x150] sm:$0xff] %vm266, %v247
    %311 = vst.msk [vmem:[#allocation2 + $0x158] sm:$0xff] %vm266, %v147
    %312 = vst.msk [vmem:[#allocation2 + $0x160] sm:$0x3] %vm269, %v263
    %313 = vst.msk [vmem:[#allocation2 + $0x168] sm:$0xff] %vm266, %v248
    %314 = vst.msk [vmem:[#allocation2 + $0x170] sm:$0xff] %vm266, %v150
    %315 = vst.msk [vmem:[#allocation2 + $0x178] sm:$0x3] %vm269, %v264
    %316 = vst.msk [vmem:[#allocation2 + $0x180] sm:$0xff] %vm266, %v249
    %317 = vst.msk [vmem:[#allocation2 + $0x188] sm:$0xff] %vm266, %v153
    %318 = vst.msk [vmem:[#allocation2 + $0x190] sm:$0x3] %vm269, %v265
    %319 = vst.msk [vmem:[#allocation2 + $0x198] sm:$0xff] %vm266, %v248
    %320 = vst.msk [vmem:[#allocation2 + $0x1a0] sm:$0xff] %vm266, %v150
    %321 = vst.msk [vmem:[#allocation2 + $0x1a8] sm:$0x3] %vm269, %v264
    %v322 = vld [vmem:[#allocation2] sm:$0xff]
    %v323 = vld [vmem:[#allocation2 + $0x8] sm:$0xff]
    %v324 = vld [vmem:[#allocation2 + $0x10] sm:$0x3]
    %v325 = vld [vmem:[#allocation2 + $0x30] sm:$0xff]
    %v326 = vld [vmem:[#allocation2 + $0x38] sm:$0xff]
    %v327 = vld [vmem:[#allocation2 + $0x40] sm:$0x3]
    %v328 = vld [vmem:[#allocation2 + $0x60] sm:$0xff]
    %v329 = vld [vmem:[#allocation2 + $0x68] sm:$0xff]
    %v330 = vld [vmem:[#allocation2 + $0x70] sm:$0x3]
    %v331 = vld [vmem:[#allocation2 + $0x90] sm:$0xff]
    %v332 = vld [vmem:[#allocation2 + $0x98] sm:$0xff]
    %v333 = vld [vmem:[#allocation2 + $0xa0] sm:$0x3]
    %v334 = vld [vmem:[#allocation2 + $0xc0] sm:$0xff]
    %v335 = vld [vmem:[#allocation2 + $0xc8] sm:$0xff]
    %v336 = vld [vmem:[#allocation2 + $0xd0] sm:$0x3]
    %v337 = vld [vmem:[#allocation2 + $0xf0] sm:$0xff]
    %v338 = vld [vmem:[#allocation2 + $0xf8] sm:$0xff]
    %v339 = vld [vmem:[#allocation2 + $0x100] sm:$0x3]
    %v340 = vld [vmem:[#allocation2 + $0x120] sm:$0xff]
    %v341 = vld [vmem:[#allocation2 + $0x128] sm:$0xff]
    %v342 = vld [vmem:[#allocation2 + $0x130] sm:$0x3]
    %v343 = vld [vmem:[#allocation2 + $0x150] sm:$0xff]
    %v344 = vld [vmem:[#allocation2 + $0x158] sm:$0xff]
    %v345 = vld [vmem:[#allocation2 + $0x160] sm:$0x3]
    %v346 = vmul.f32 %v322, 0.25
    %v347 = vmul.f32 %v323, 0.25
    %v348 = vmul.f32 %v324, 0.25
    %v349 = vmul.f32 %v325, 0.25
    %v350 = vmul.f32 %v326, 0.25
    %v351 = vmul.f32 %v327, 0.25
    %v352 = vmul.f32 %v328, 0.25
    %v353 = vmul.f32 %v329, 0.25
    %v354 = vmul.f32 %v330, 0.25
    %v355 = vmul.f32 %v331, 0.25
    %v356 = vmul.f32 %v332, 0.25
    %v357 = vmul.f32 %v333, 0.25
    %v358 = vmul.f32 %v334, 0.25
    %v359 = vmul.f32 %v335, 0.25
    %v360 = vmul.f32 %v336, 0.25
    %v361 = vmul.f32 %v337, 0.25
    %v362 = vmul.f32 %v338, 0.25
    %v363 = vmul.f32 %v339, 0.25
    %v364 = vmul.f32 %v340, 0.25
    %v365 = vmul.f32 %v341, 0.25
    %v366 = vmul.f32 %v342, 0.25
    %v367 = vmul.f32 %v343, 0.25
    %v368 = vmul.f32 %v344, 0.25
    %v369 = vmul.f32 %v345, 0.25
    %s370 = scalar_lea.vmem [#allocation2], 24
    %v371 = vld [vmem:[%s370] sm:$0xff]
    %v372 = vld [vmem:[%s370 + $0x8] sm:$0xff]
    %v373 = vld [vmem:[%s370 + $0x10] sm:$0x3]
    %v374 = vld [vmem:[%s370 + $0x30] sm:$0xff]
    %v375 = vld [vmem:[%s370 + $0x38] sm:$0xff]
    %v376 = vld [vmem:[%s370 + $0x40] sm:$0x3]
    %v377 = vld [vmem:[%s370 + $0x60] sm:$0xff]
    %v378 = vld [vmem:[%s370 + $0x68] sm:$0xff]
    %v379 = vld [vmem:[%s370 + $0x70] sm:$0x3]
    %v380 = vld [vmem:[%s370 + $0x90] sm:$0xff]
    %v381 = vld [vmem:[%s370 + $0x98] sm:$0xff]
    %v382 = vld [vmem:[%s370 + $0xa0] sm:$0x3]
    %v383 = vld [vmem:[%s370 + $0xc0] sm:$0xff]
    %v384 = vld [vmem:[%s370 + $0xc8] sm:$0xff]
    %v385 = vld [vmem:[%s370 + $0xd0] sm:$0x3]
    %v386 = vld [vmem:[%s370 + $0xf0] sm:$0xff]
    %v387 = vld [vmem:[%s370 + $0xf8] sm:$0xff]
    %v388 = vld [vmem:[%s370 + $0x100] sm:$0x3]
    %v389 = vld [vmem:[%s370 + $0x120] sm:$0xff]
    %v390 = vld [vmem:[%s370 + $0x128] sm:$0xff]
    %v391 = vld [vmem:[%s370 + $0x130] sm:$0x3]
    %v392 = vld [vmem:[%s370 + $0x150] sm:$0xff]
    %v393 = vld [vmem:[%s370 + $0x158] sm:$0xff]
    %v394 = vld [vmem:[%s370 + $0x160] sm:$0x3]
    %v395 = vmul.f32 %v371, 0.5
    %v396 = vmul.f32 %v372, 0.5
    %v397 = vmul.f32 %v373, 0.5
    %v398 = vmul.f32 %v374, 0.5
    %v399 = vmul.f32 %v375, 0.5
    %v400 = vmul.f32 %v376, 0.5
    %v401 = vmul.f32 %v377, 0.5
    %v402 = vmul.f32 %v378, 0.5
    %v403 = vmul.f32 %v379, 0.5
    %v404 = vmul.f32 %v380, 0.5
    %v405 = vmul.f32 %v381, 0.5
    %v406 = vmul.f32 %v382, 0.5
    %v407 = vmul.f32 %v383, 0.5
    %v408 = vmul.f32 %v384, 0.5
    %v409 = vmul.f32 %v385, 0.5
    %v410 = vmul.f32 %v386, 0.5
    %v411 = vmul.f32 %v387, 0.5
    %v412 = vmul.f32 %v388, 0.5
    %v413 = vmul.f32 %v389, 0.5
    %v414 = vmul.f32 %v390, 0.5
    %v415 = vmul.f32 %v391, 0.5
    %v416 = vmul.f32 %v392, 0.5
    %v417 = vmul.f32 %v393, 0.5
    %v418 = vmul.f32 %v394, 0.5
    %s419 = scalar_lea.vmem [#allocation2], 48
    %v420 = vld [vmem:[%s419] sm:$0xff]
    %v421 = vld [vmem:[%s419 + $0x8] sm:$0xff]
    %v422 = vld [vmem:[%s419 + $0x10] sm:$0x3]
    %v423 = vld [vmem:[%s419 + $0x30] sm:$0xff]
    %v424 = vld [vmem:[%s419 + $0x38] sm:$0xff]
    %v425 = vld [vmem:[%s419 + $0x40] sm:$0x3]
    %v426 = vld [vmem:[%s419 + $0x60] sm:$0xff]
    %v427 = vld [vmem:[%s419 + $0x68] sm:$0xff]
    %v428 = vld [vmem:[%s419 + $0x70] sm:$0x3]
    %v429 = vld [vmem:[%s419 + $0x90] sm:$0xff]
    %v430 = vld [vmem:[%s419 + $0x98] sm:$0xff]
    %v431 = vld [vmem:[%s419 + $0xa0] sm:$0x3]
    %v432 = vld [vmem:[%s419 + $0xc0] sm:$0xff]
    %v433 = vld [vmem:[%s419 + $0xc8] sm:$0xff]
    %v434 = vld [vmem:[%s419 + $0xd0] sm:$0x3]
    %v435 = vld [vmem:[%s419 + $0xf0] sm:$0xff]
    %v436 = vld [vmem:[%s419 + $0xf8] sm:$0xff]
    %v437 = vld [vmem:[%s419 + $0x100] sm:$0x3]
    %v438 = vld [vmem:[%s419 + $0x120] sm:$0xff]
    %v439 = vld [vmem:[%s419 + $0x128] sm:$0xff]
    %v440 = vld [vmem:[%s419 + $0x130] sm:$0x3]
    %v441 = vld [vmem:[%s419 + $0x150] sm:$0xff]
    %v442 = vld [vmem:[%s419 + $0x158] sm:$0xff]
    %v443 = vld [vmem:[%s419 + $0x160] sm:$0x3]
    %v444 = vmul.f32 %v420, 0.25
    %v445 = vmul.f32 %v421, 0.25
    %v446 = vmul.f32 %v422, 0.25
    %v447 = vmul.f32 %v423, 0.25
    %v448 = vmul.f32 %v424, 0.25
    %v449 = vmul.f32 %v425, 0.25
    %v450 = vmul.f32 %v426, 0.25
    %v451 = vmul.f32 %v427, 0.25
    %v452 = vmul.f32 %v428, 0.25
    %v453 = vmul.f32 %v429, 0.25
    %v454 = vmul.f32 %v430, 0.25
    %v455 = vmul.f32 %v431, 0.25
    %v456 = vmul.f32 %v432, 0.25
    %v457 = vmul.f32 %v433, 0.25
    %v458 = vmul.f32 %v434, 0.25
    %v459 = vmul.f32 %v435, 0.25
    %v460 = vmul.f32 %v436, 0.25
    %v461 = vmul.f32 %v437, 0.25
    %v462 = vmul.f32 %v438, 0.25
    %v463 = vmul.f32 %v439, 0.25
    %v464 = vmul.f32 %v440, 0.25
    %v465 = vmul.f32 %v441, 0.25
    %v466 = vmul.f32 %v442, 0.25
    %v467 = vmul.f32 %v443, 0.25
    %v468 = vadd.f32 %v346, %v395
    %v469 = vadd.f32 %v347, %v396
    %v470 = vadd.f32 %v348, %v397
    %v471 = vadd.f32 %v349, %v398
    %v472 = vadd.f32 %v350, %v399
    %v473 = vadd.f32 %v351, %v400
    %v474 = vadd.f32 %v352, %v401
    %v475 = vadd.f32 %v353, %v402
    %v476 = vadd.f32 %v354, %v403
    %v477 = vadd.f32 %v355, %v404
    %v478 = vadd.f32 %v356, %v405
    %v479 = vadd.f32 %v357, %v406
    %v480 = vadd.f32 %v358, %v407
    %v481 = vadd.f32 %v359, %v408
    %v482 = vadd.f32 %v360, %v409
    %v483 = vadd.f32 %v361, %v410
    %v484 = vadd.f32 %v362, %v411
    %v485 = vadd.f32 %v363, %v412
    %v486 = vadd.f32 %v364, %v413
    %v487 = vadd.f32 %v365, %v414
    %v488 = vadd.f32 %v366, %v415
    %v489 = vadd.f32 %v367, %v416
    %v490 = vadd.f32 %v368, %v417
    %v491 = vadd.f32 %v369, %v418
    %v492 = vadd.f32 %v468, %v444
    %v493 = vadd.f32 %v469, %v445
    %v494 = vadd.f32 %v470, %v446
    %v495 = vadd.f32 %v471, %v447
    %v496 = vadd.f32 %v472, %v448
    %v497 = vadd.f32 %v473, %v449
    %v498 = vadd.f32 %v474, %v450
    %v499 = vadd.f32 %v475, %v451
    %v500 = vadd.f32 %v476, %v452
    %v501 = vadd.f32 %v477, %v453
    %v502 = vadd.f32 %v478, %v454
    %v503 = vadd.f32 %v479, %v455
    %v504 = vadd.f32 %v480, %v456
    %v505 = vadd.f32 %v481, %v457
    %v506 = vadd.f32 %v482, %v458
    %v507 = vadd.f32 %v483, %v459
    %v508 = vadd.f32 %v484, %v460
    %v509 = vadd.f32 %v485, %v461
    %v510 = vadd.f32 %v486, %v462
    %v511 = vadd.f32 %v487, %v463
    %v512 = vadd.f32 %v488, %v464
    %v513 = vadd.f32 %v489, %v465
    %v514 = vadd.f32 %v490, %v466
    %v515 = vadd.f32 %v491, %v467
    %516 = vst.msk [vmem:[#allocation3] sm:$0xff] %vm266, %v492
    %517 = vst.msk [vmem:[#allocation3 + $0x8] sm:$0xff] %vm266, %v493
    %518 = vst.msk [vmem:[#allocation3 + $0x10] sm:$0x3] %vm269, %v494
    %519 = vst.msk [vmem:[#allocation3 + $0x18] sm:$0xff] %vm266, %v495
    %520 = vst.msk [vmem:[#allocation3 + $0x20] sm:$0xff] %vm266, %v496
    %521 = vst.msk [vmem:[#allocation3 + $0x28] sm:$0x3] %vm269, %v497
    %522 = vst.msk [vmem:[#allocation3 + $0x30] sm:$0xff] %vm266, %v498
    %523 = vst.msk [vmem:[#allocation3 + $0x38] sm:$0xff] %vm266, %v499
    %524 = vst.msk [vmem:[#allocation3 + $0x40] sm:$0x3] %vm269, %v500
    %525 = vst.msk [vmem:[#allocation3 + $0x48] sm:$0xff] %vm266, %v501
    %526 = vst.msk [vmem:[#allocation3 + $0x50] sm:$0xff] %vm266, %v502
    %527 = vst.msk [vmem:[#allocation3 + $0x58] sm:$0x3] %vm269, %v503
    %528 = vst.msk [vmem:[#allocation3 + $0x60] sm:$0xff] %vm266, %v504
    %529 = vst.msk [vmem:[#allocation3 + $0x68] sm:$0xff] %vm266, %v505
    %530 = vst.msk [vmem:[#allocation3 + $0x70] sm:$0x3] %vm269, %v506
    %531 = vst.msk [vmem:[#allocation3 + $0x78] sm:$0xff] %vm266, %v507
    %532 = vst.msk [vmem:[#allocation3 + $0x80] sm:$0xff] %vm266, %v508
    %533 = vst.msk [vmem:[#allocation3 + $0x88] sm:$0x3] %vm269, %v509
    %534 = vst.msk [vmem:[#allocation3 + $0x90] sm:$0xff] %vm266, %v510
    %535 = vst.msk [vmem:[#allocation3 + $0x98] sm:$0xff] %vm266, %v511
    %536 = vst.msk [vmem:[#allocation3 + $0xa0] sm:$0x3] %vm269, %v512
    %537 = vst.msk [vmem:[#allocation3 + $0xa8] sm:$0xff] %vm266, %v513
    %538 = vst.msk [vmem:[#allocation3 + $0xb0] sm:$0xff] %vm266, %v514
    %539 = vst.msk [vmem:[#allocation3 + $0xb8] sm:$0x3] %vm269, %v515
    %v540 = vld [vmem:[#allocation3] ss:$2 sm:$0xff]
    %s541 = scalar_lea.vmem [#allocation3], 24
    %v542 = vld [vmem:[%s541] ss:$2 sm:$0xff]
    %s543 = scalar_lea.vmem [#allocation3], 48
    %v544 = vld [vmem:[%s543] ss:$2 sm:$0xff]
    %s545 = scalar_lea.vmem [#allocation3], 72
    %v546 = vld [vmem:[%s545] ss:$2 sm:$0xff]
    %s547 = scalar_lea.vmem [#allocation3], 96
    %v548 = vld [vmem:[%s547] ss:$2 sm:$0xff]
    %s549 = scalar_lea.vmem [#allocation3], 120
    %v550 = vld [vmem:[%s549] ss:$2 sm:$0xff]
    %s551 = scalar_lea.vmem [#allocation3], 144
    %v552 = vld [vmem:[%s551] ss:$2 sm:$0xff]
    %s553 = scalar_lea.vmem [#allocation3], 168
    %v554 = vld [vmem:[%s553] ss:$2 sm:$0xff]
    %v555 = vmul.f32 %v540, 0.25
    %v556 = vmul.f32 %v542, 0.25
    %v557 = vmul.f32 %v544, 0.25
    %v558 = vmul.f32 %v546, 0.25
    %v559 = vmul.f32 %v548, 0.25
    %v560 = vmul.f32 %v550, 0.25
    %v561 = vmul.f32 %v552, 0.25
    %v562 = vmul.f32 %v554, 0.25
    %s563 = scalar_lea.vmem [#allocation3], 1
    %v564 = vld [vmem:[%s563] ss:$2 sm:$0xff]
    %s565 = scalar_lea.vmem [#allocation3], 25
    %v566 = vld [vmem:[%s565] ss:$2 sm:$0xff]
    %s567 = scalar_lea.vmem [#allocation3], 49
    %v568 = vld [vmem:[%s567] ss:$2 sm:$0xff]
    %s569 = scalar_lea.vmem [#allocation3], 73
    %v570 = vld [vmem:[%s569] ss:$2 sm:$0xff]
    %s571 = scalar_lea.vmem [#allocation3], 97
    %v572 = vld [vmem:[%s571] ss:$2 sm:$0xff]
    %s573 = scalar_lea.vmem [#allocation3], 121
    %v574 = vld [vmem:[%s573] ss:$2 sm:$0xff]
    %s575 = scalar_lea.vmem [#allocation3], 145
    %v576 = vld [vmem:[%s575] ss:$2 sm:$0xff]
    %s577 = scalar_lea.vmem [#allocation3], 169
    %v578 = vld [vmem:[%s577] ss:$2 sm:$0xff]
    %v579 = vmul.f32 %v564, 0.5
    %v580 = vmul.f32 %v566, 0.5
    %v581 = vmul.f32 %v568, 0.5
    %v582 = vmul.f32 %v570, 0.5
    %v583 = vmul.f32 %v572, 0.5
    %v584 = vmul.f32 %v574, 0.5
    %v585 = vmul.f32 %v576, 0.5
    %v586 = vmul.f32 %v578, 0.5
    %s587 = scalar_lea.vmem [#allocation3], 2
    %v588 = vld [vmem:[%s587] ss:$2 sm:$0xff]
    %s589 = scalar_lea.vmem [#allocation3], 26
    %v590 = vld [vmem:[%s589] ss:$2 sm:$0xff]
    %s591 = scalar_lea.vmem [#allocation3], 50
    %v592 = vld [vmem:[%s591] ss:$2 sm:$0xff]
    %s593 = scalar_lea.vmem [#allocation3], 74
    %v594 = vld [vmem:[%s593] ss:$2 sm:$0xff]
    %s595 = scalar_lea.vmem [#allocation3], 98
    %v596 = vld [vmem:[%s595] ss:$2 sm:$0xff]
    %s597 = scalar_lea.vmem [#allocation3], 122
    %v598 = vld [vmem:[%s597] ss:$2 sm:$0xff]
    %s599 = scalar_lea.vmem [#allocation3], 146
    %v600 = vld [vmem:[%s599] ss:$2 sm:$0xff]
    %s601 = scalar_lea.vmem [#allocation3], 170
    %v602 = vld [vmem:[%s601] ss:$2 sm:$0xff]
    %v603 = vmul.f32 %v588, 0.25
    %v604 = vmul.f32 %v590, 0.25
    %v605 = vmul.f32 %v592, 0.25
    %v606 = vmul.f32 %v594, 0.25
    %v607 = vmul.f32 %v596, 0.25
    %v608 = vmul.f32 %v598, 0.25
    %v609 = vmul.f32 %v600, 0.25
    %v610 = vmul.f32 %v602, 0.25
    %v611 = vadd.f32 %v555, %v579
    %v612 = vadd.f32 %v556, %v580
    %v613 = vadd.f32 %v557, %v581
    %v614 = vadd.f32 %v558, %v582
    %v615 = vadd.f32 %v559, %v583
    %v616 = vadd.f32 %v560, %v584
    %v617 = vadd.f32 %v561, %v585
    %v618 = vadd.f32 %v562, %v586
    %v619 = vadd.f32 %v611, %v603
    %v620 = vadd.f32 %v612, %v604
    %v621 = vadd.f32 %v613, %v605
    %v622 = vadd.f32 %v614, %v606
    %v623 = vadd.f32 %v615, %v607
    %v624 = vadd.f32 %v616, %v608
    %v625 = vadd.f32 %v617, %v609
    %v626 = vadd.f32 %v618, %v610
    %627 = vst.msk [vmem:[#allocation4] sm:$0xff] %vm266, %v619
    %628 = vst.msk [vmem:[#allocation4 + $0x8] sm:$0xff] %vm266, %v620
    %629 = vst.msk [vmem:[#allocation4 + $0x10] sm:$0xff] %vm266, %v621
    %630 = vst.msk [vmem:[#allocation4 + $0x18] sm:$0xff] %vm266, %v622
    %631 = vst.msk [vmem:[#allocation4 + $0x20] sm:$0xff] %vm266, %v623
    %632 = vst.msk [vmem:[#allocation4 + $0x28] sm:$0xff] %vm266, %v624
    %633 = vst.msk [vmem:[#allocation4 + $0x30] sm:$0xff] %vm266, %v625
    %634 = vst.msk [vmem:[#allocation4 + $0x38] sm:$0xff] %vm266, %v626
    // Predicated region
    $region6: #{tpu_custom_call.1} parent=1 // pred_check
      _
    $region7: #{tpu_custom_call.1} parent=1 // pred_check_branch
      %636 = sbr.rel (0) target = $region9
    $region8: #{tpu_custom_call.1} parent=1 // pred_region
      %s638 = ssub.s32 1024, 1024
      %639 = vsyncadd [#allocation5], %s638
      %s640 = sshll.u32 [#allocation4], 4
      %s641 = int_to_ptr.vmem [resolvable:$true] %s640
      %646 = dma.vmem_to_hbm [thread:$0]  %s641, 1024, %s1, [#allocation5], 128, 128, 8
    $region9: #{tpu_custom_call.1} parent=1 // pred_fallthru
      _
    // Predicated region
    $region10: #{tpu_custom_call.1} parent=1 // pred_check
      _
    $region11: #{tpu_custom_call.1} parent=1 // pred_check_branch
      %648 = sbr.rel (0) target = $region13
    $region12: #{tpu_custom_call.1} parent=1 // pred_region
      %649 = dma.done [#allocation5], 1024
    $region13: #{tpu_custom_call.1} parent=1 // pred_fallthru
      _
    %650 = vsyncpa [#allocation5], 1

</llo_original>
